<compile_context>
chip_gen: v7x
topology: tpu7x:2x2x1
jax: 0.10.0
libtpu: 0.0.40
codegen_flags: <defaults>
</compile_context>

<pallas_src>
import functools

import jax
import jax.numpy as jnp
from jax import lax
from jax.experimental import pallas as pl
from jax.experimental.pallas import tpu as pltpu


def _highpass_kernel(x_ref, m_ref, o_ref, *, inv_w, width, lanes):
    """One (T, L) block of N = B*C images, each flattened to L = H*W lanes.

    Separable 3x3 box sum with zero padding via lane rolls:
      rowsum = x + roll(x, +1)*mask_left + roll(x, -1)*mask_right
      box    = rowsum + roll(rowsum, +W)*mask_up + roll(rowsum, -W)*mask_down
    out = (9*x - box) / w_hpf  ==  (8*center - 8 neighbors) / w_hpf
    (pltpu.roll follows np.roll semantics: out[i] = in[i - shift mod L];
     negative shifts written as L - s.)
    """
    W, L = width, lanes
    x = x_ref[...].astype(jnp.float32)                                # (T, L)

    rowsum = x
    if W > 1:
        left = pltpu.roll(x, shift=1, axis=1) * m_ref[0:1, :]
        right = pltpu.roll(x, shift=L - 1, axis=1) * m_ref[1:2, :]
        rowsum = rowsum + left + right

    box = rowsum
    if L > W:  # H > 1
        up = pltpu.roll(rowsum, shift=W, axis=1) * m_ref[2:3, :]
        down = pltpu.roll(rowsum, shift=L - W, axis=1) * m_ref[3:4, :]
        box = box + up + down

    o_ref[...] = ((9.0 * x - box) * inv_w).astype(o_ref.dtype)


def _block_rows(n, row_bytes):
    """Rows per block: ~2 MiB of input, multiple of 8, aim for >= 8 grid steps."""
    budget = max(1, (2 << 20) // row_bytes)
    if n <= max(8, budget):
        return n                      # full extent: always a legal block dim
    per_step = max(8, (budget // 8) * 8)
    cap_for_8_steps = max(8, ((n // 8) // 8) * 8)
    return min(per_step, cap_for_8_steps)


def highpass(x: jax.Array, w_hpf: float = 1.0) -> jax.Array:
    """Equivalent of HighPass(w_hpf).forward(x) for NCHW x."""
    B, C, H, W = x.shape
    N, L = B * C, H * W
    xf = x.reshape(N, L)              # contiguous-dim merge: no data movement

    # Edge-validity masks (0/1) per lane of the flattened (H, W) image,
    # computed once in the wrapper (plain XLA) and broadcast over block rows.
    lane = jnp.arange(L, dtype=jnp.int32)
    col = lane % W
    row = lane // W
    masks = jnp.stack([
        col != 0,                     # left neighbor exists
        col != W - 1,                 # right neighbor exists
        row != 0,                     # upper neighbor exists
        row != H - 1,                 # lower neighbor exists
    ]).astype(jnp.float32)            # (4, L)

    itemsize = x.dtype.itemsize
    T = _block_rows(N, L * itemsize)
    grid = (pl.cdiv(N, T),)
    # TODO(synk): add H-strip tiling with a 1-row halo for very large images
    # (when a single H*W row no longer fits a ~2 MiB VMEM block).

    elems = N * L
    cost = pl.CostEstimate(
        flops=11 * elems,
        transcendentals=0,
        bytes_accessed=2 * elems * itemsize + masks.size * 4,
    )

    out = pl.pallas_call(
        functools.partial(_highpass_kernel, inv_w=1.0 / float(w_hpf),
                          width=W, lanes=L),
        out_shape=jax.ShapeDtypeStruct((N, L), x.dtype),
        grid=grid,
        in_specs=[pl.BlockSpec((T, L), lambda i: (i, 0)),
                  pl.BlockSpec((4, L), lambda i: (0, 0))],
        out_specs=pl.BlockSpec((T, L), lambda i: (i, 0)),
        compiler_params=pltpu.CompilerParams(
            dimension_semantics=("parallel",),
            vmem_limit_bytes=32 * 1024 * 1024),
        cost_estimate=cost,
    )(xf, masks)
    return out.reshape(B, C, H, W)


def _reference(x: jax.Array, w_hpf: float) -> jax.Array:
    """Pure-JAX reference matching F.conv2d(x, filt, padding=1, groups=C)."""
    C = x.shape[1]
    filt = jnp.array([[-1.0, -1.0, -1.0],
                      [-1.0, 8.0, -1.0],
                      [-1.0, -1.0, -1.0]], dtype=jnp.float32) / w_hpf
    filt = jnp.broadcast_to(filt, (C, 1, 3, 3)).astype(x.dtype)
    return lax.conv_general_dilated(
        x, filt, window_strides=(1, 1), padding=[(1, 1), (1, 1)],
        dimension_numbers=("NCHW", "OIHW", "NCHW"), feature_group_count=C)


if __name__ == "__main__":
    key = jax.random.PRNGKey(0)
    B, C, H, W = 2, 4, 16, 16
    w_hpf = 1.0  # deterministic "parameter" of the module
    x = jax.random.normal(key, (B, C, H, W), dtype=jnp.float32)

    y = highpass(x, w_hpf)
    y = jax.block_until_ready(y)

    y_ref = _reference(x, w_hpf)
    assert y.shape == (B, C, H, W)
    assert jnp.allclose(y, y_ref, atol=1e-4, rtol=1e-4)

    print("KERNEL_OK")
</pallas_src>

<mosaic_0001>
module attributes {stable_mosaic.version = 11 : i64} {
  func.func @_highpass_kernel(%arg0: i32, %arg1: memref<8x256xf32, #tpu.memory_space<vmem>>, %arg2: memref<4x256xf32, #tpu.memory_space<vmem>>, %arg3: memref<8x256xf32, #tpu.memory_space<vmem>>) attributes {dimension_semantics = [#tpu.dimension_semantics<parallel>], iteration_bounds = array<i64: 1>, scalar_prefetch = 0 : i64, scratch_operands = 0 : i64, tpu.core_type = #tpu.core_type<tc>, window_params = [{transform_indices = @transform_0, window_bounds = array<i64: 8, 256>}, {pipeline_mode = #tpu.pipeline_mode<synchronous>, transform_indices = @transform_1, window_bounds = array<i64: 4, 256>}, {transform_indices = @transform_2, window_bounds = array<i64: 8, 256>}]} {
    %c0 = arith.constant 0 : index
    %c0_0 = arith.constant 0 : index
    %0 = vector.load %arg1[%c0, %c0_0] : memref<8x256xf32, #tpu.memory_space<vmem>>, vector<8x256xf32>
    %c1_i32 = arith.constant 1 : i32
    %1 = tpu.dynamic_rotate %0 by %c1_i32 dim 1 : vector<8x256xf32>, i32 -> vector<8x256xf32>
    %c0_1 = arith.constant 0 : index
    %c0_2 = arith.constant 0 : index
    %2 = vector.load %arg2[%c0_1, %c0_2] : memref<4x256xf32, #tpu.memory_space<vmem>>, vector<1x256xf32>
    %3 = vector.broadcast %2 : vector<1x256xf32> to vector<8x256xf32>
    %4 = arith.mulf %1, %3 : vector<8x256xf32>
    %c255_i32 = arith.constant 255 : i32
    %5 = tpu.dynamic_rotate %0 by %c255_i32 dim 1 : vector<8x256xf32>, i32 -> vector<8x256xf32>
    %c1 = arith.constant 1 : index
    %c0_3 = arith.constant 0 : index
    %6 = vector.load %arg2[%c1, %c0_3] : memref<4x256xf32, #tpu.memory_space<vmem>>, vector<1x256xf32>
    %7 = vector.broadcast %6 : vector<1x256xf32> to vector<8x256xf32>
    %8 = arith.mulf %5, %7 : vector<8x256xf32>
    %9 = arith.addf %0, %4 : vector<8x256xf32>
    %10 = arith.addf %9, %8 : vector<8x256xf32>
    %c16_i32 = arith.constant 16 : i32
    %11 = tpu.dynamic_rotate %10 by %c16_i32 dim 1 : vector<8x256xf32>, i32 -> vector<8x256xf32>
    %c2 = arith.constant 2 : index
    %c0_4 = arith.constant 0 : index
    %12 = vector.load %arg2[%c2, %c0_4] : memref<4x256xf32, #tpu.memory_space<vmem>>, vector<1x256xf32>
    %13 = vector.broadcast %12 : vector<1x256xf32> to vector<8x256xf32>
    %14 = arith.mulf %11, %13 : vector<8x256xf32>
    %c240_i32 = arith.constant 240 : i32
    %15 = tpu.dynamic_rotate %10 by %c240_i32 dim 1 : vector<8x256xf32>, i32 -> vector<8x256xf32>
    %c3 = arith.constant 3 : index
    %c0_5 = arith.constant 0 : index
    %16 = vector.load %arg2[%c3, %c0_5] : memref<4x256xf32, #tpu.memory_space<vmem>>, vector<1x256xf32>
    %17 = vector.broadcast %16 : vector<1x256xf32> to vector<8x256xf32>
    %18 = arith.mulf %15, %17 : vector<8x256xf32>
    %19 = arith.addf %10, %14 : vector<8x256xf32>
    %20 = arith.addf %19, %18 : vector<8x256xf32>
    %cst = arith.constant 9.000000e+00 : f32
    %21 = vector.broadcast %cst : f32 to vector<8x256xf32>
    %22 = arith.mulf %21, %0 : vector<8x256xf32>
    %23 = arith.subf %22, %20 : vector<8x256xf32>
    %cst_6 = arith.constant 1.000000e+00 : f32
    %24 = vector.broadcast %cst_6 : f32 to vector<8x256xf32>
    %25 = arith.mulf %23, %24 : vector<8x256xf32>
    %c0_7 = arith.constant 0 : index
    %c0_8 = arith.constant 0 : index
    %26 = vector.load %arg3[%c0_7, %c0_8] : memref<8x256xf32, #tpu.memory_space<vmem>>, vector<8x256xf32>
    tpu.vector_store %arg3[%c0_7, %c0_8], %25 {strides = array<i32>} : memref<8x256xf32, #tpu.memory_space<vmem>>, vector<8x256xf32>,
    return
  }
  func.func @transform_0(%arg0: i32) -> (i32, i32) {
    %c0_i32 = arith.constant 0 : i32
    %c0_i32_0 = arith.constant 0 : i32
    return %arg0, %c0_i32 : i32, i32
  }
  func.func @transform_1(%arg0: i32) -> (i32, i32) {
    %c0_i32 = arith.constant 0 : i32
    %c0_i32_0 = arith.constant 0 : i32
    %c0_i32_1 = arith.constant 0 : i32
    return %c0_i32, %c0_i32_0 : i32, i32
  }
  func.func @transform_2(%arg0: i32) -> (i32, i32) {
    %c0_i32 = arith.constant 0 : i32
    %c0_i32_0 = arith.constant 0 : i32
    return %arg0, %c0_i32 : i32, i32
  }
}

</mosaic_0001>

<llo_original>
// kernel: tpu_custom_call.1
$region0: #{tpu_custom_call.1}
  #allocation0 [shape = 'u32[]', space=smem, size = 0x4, offset = 0x4, fixed_abs, tag = 'smem constant byte address 0x4 - core index']
  #allocation1 [shape = 'u32[144,128]{1,0:T(1,128)}', space=vmem, size = 0x12000, scoped, tag = 'internal scratch']
  %s0 = inlined_call_operand.hbm [shape: f32[8,256], index: 0, kind: input, shape index: {}]
  %s1 = inlined_call_operand.hbm [shape: f32[4,256], index: 1, kind: input, shape index: {}]
  %s2 = inlined_call_operand.hbm [shape: f32[8,256], index: 2, kind: output, shape index: {}]
  %s3 = sld [smem:[#allocation0]]
  $region26: #{tpu_custom_call.1} parent=0
    _
  %s5 = ssub.s32 1, %s3
  %s6 = scalar_select 0, %s5, %s3
  $region1: #{tpu_custom_call.1} parent=0
    #allocation2 [shape = 'u8[8192]{0}', space=vmem, size = 0x2000, scoped, tag = 'input window, operand 0, single buffered']
    #allocation3 [shape = 's32[1]{0}', space=sflag, size = 0x4, scoped, tag = 'scoped memory for tpu_custom_call.1']
    #allocation4 [shape = 's32[1]{0}', space=sflag, size = 0x4, scoped, tag = 'scoped memory for tpu_custom_call.1']
    #allocation5 [shape = 'u8[4096]{0}', space=vmem, size = 0x1000, scoped, tag = 'input window, operand 1, single buffered']
    #allocation6 [shape = 's32[1]{0}', space=sflag, size = 0x4, scoped, tag = 'scoped memory for tpu_custom_call.1']
    #allocation7 [shape = 'u8[8192]{0}', space=vmem, size = 0x2000, scoped, tag = 'output window, operand 0, single buffered']
    %7 = vsyncpa [#allocation3], 0
    %8 = vsyncpa [#allocation6], 0
    %9 = vsyncpa [#allocation4], 0
    // Predicated region
    $region2: #{tpu_custom_call.1} parent=1 // pred_check
      _
    $region3: #{tpu_custom_call.1} parent=1 // pred_check_branch
      %11 = sbr.rel (0) target = $region5
    $region4: #{tpu_custom_call.1} parent=1 // pred_region
      %s13 = ssub.s32 256, 256
      %14 = vsyncadd [#allocation3], %s13
      %s16 = sshll.u32 [#allocation2], 4
      %s17 = int_to_ptr.vmem [resolvable:$true] %s16
      %19 = dma.hbm_to_vmem [thread:$0]  %s0, 256, %s17, [#allocation3]
    $region5: #{tpu_custom_call.1} parent=1 // pred_fallthru
      _
    // Predicated region
    $region6: #{tpu_custom_call.1} parent=1 // pred_check
      _
    $region7: #{tpu_custom_call.1} parent=1 // pred_check_branch
      %21 = sbr.rel (0) target = $region9
    $region8: #{tpu_custom_call.1} parent=1 // pred_region
      %s23 = ssub.s32 128, 128
      %24 = vsyncadd [#allocation6], %s23
      %s26 = sshll.u32 [#allocation5], 4
      %s27 = int_to_ptr.vmem [resolvable:$true] %s26
      %29 = dma.hbm_to_vmem [thread:$0]  %s1, 128, %s27, [#allocation6]
    $region9: #{tpu_custom_call.1} parent=1 // pred_fallthru
      _
    // Predicated region
    $region10: #{tpu_custom_call.1} parent=1 // pred_check
      _
    $region11: #{tpu_custom_call.1} parent=1 // pred_check_branch
      %31 = sbr.rel (0) target = $region13
    $region12: #{tpu_custom_call.1} parent=1 // pred_region
      %32 = dma.done [#allocation3], 256
    $region13: #{tpu_custom_call.1} parent=1 // pred_fallthru
      _
    // Predicated region
    $region14: #{tpu_custom_call.1} parent=1 // pred_check
      _
    $region15: #{tpu_custom_call.1} parent=1 // pred_check_branch
      %34 = sbr.rel (0) target = $region17
    $region16: #{tpu_custom_call.1} parent=1 // pred_region
      %35 = dma.done [#allocation6], 128
    $region17: #{tpu_custom_call.1} parent=1 // pred_fallthru
      _
    %v36 = vld [vmem:[#allocation2] sm:$0xff]
    %v37 = vld [vmem:[#allocation2 + $0x8] sm:$0xff]
    %38 = vrot.lane.b32.xlu0 %v36, 1
    %v39 = vpop.permute.xlu0 %38
    %40 = vrot.lane.b32.xlu0 %v37, 1
    %v41 = vpop.permute.xlu0 %40
    %v42 = vlaneseq
    %v43 = vand.u32 %v42, 127
    %vm44 = vcmp.lt.s32.totalorder %v43, 1
    %v45 = vsel %vm44, %v39, %v41
    %v46 = vsel %vm44, %v41, %v39
    %v47 = vld [vmem:[#allocation5] ss:$4 sm:$0x3]
    %v49 = vlaneseq
    %v50 = vshrl.u32 %v49, 7
    %v51 = vsub.s32 0, %v50
    %v52 = vrot.slane %v47, %v51
    %v53 = vlaneseq
    %v54 = vshrl.u32 %v53, 7
    %v55 = vsub.s32 1, %v54
    %v56 = vrot.slane %v47, %v55
    %v59 = vmul.f32 %v46, %v52
    %v60 = vmul.f32 %v45, %v56
    %61 = vrot.lane.b32.xlu0 %v36, 127
    %v62 = vpop.permute.xlu0 %61
    %63 = vrot.lane.b32.xlu0 %v37, 127
    %v64 = vpop.permute.xlu0 %63
    %vm65 = vcmp.lt.s32.totalorder %v43, 127
    %v66 = vsel %vm65, %v62, %v64
    %v67 = vsel %vm65, %v64, %v62
    %s68 = scalar_lea.vmem [#allocation5], 1
    %v69 = vld [vmem:[%s68] ss:$4 sm:$0x3]
    %v71 = vlaneseq
    %v72 = vshrl.u32 %v71, 7
    %v73 = vsub.s32 0, %v72
    %v74 = vrot.slane %v69, %v73
    %v75 = vlaneseq
    %v76 = vshrl.u32 %v75, 7
    %v77 = vsub.s32 1, %v76
    %v78 = vrot.slane %v69, %v77
    %v81 = vmul.f32 %v66, %v74
    %v82 = vmul.f32 %v67, %v78
    %v83 = vadd.f32 %v36, %v59
    %v84 = vadd.f32 %v37, %v60
    %v85 = vadd.f32 %v83, %v81
    %v86 = vadd.f32 %v84, %v82
    %87 = vrot.lane.b32.xlu0 %v85, 16
    %v88 = vpop.permute.xlu0 %87
    %89 = vrot.lane.b32.xlu0 %v86, 16
    %v90 = vpop.permute.xlu0 %89
    %vm91 = vcmp.lt.s32.totalorder %v43, 16
    %v92 = vsel %vm91, %v88, %v90
    %v93 = vsel %vm91, %v90, %v88
    %s94 = scalar_lea.vmem [#allocation5], 2
    %v95 = vld [vmem:[%s94] ss:$4 sm:$0x3]
    %v97 = vlaneseq
    %v98 = vshrl.u32 %v97, 7
    %v99 = vsub.s32 0, %v98
    %v100 = vrot.slane %v95, %v99
    %v101 = vlaneseq
    %v102 = vshrl.u32 %v101, 7
    %v103 = vsub.s32 1, %v102
    %v104 = vrot.slane %v95, %v103
    %v107 = vmul.f32 %v93, %v100
    %v108 = vmul.f32 %v92, %v104
    %109 = vrot.lane.b32.xlu0 %v85, 112
    %v110 = vpop.permute.xlu0 %109
    %111 = vrot.lane.b32.xlu0 %v86, 112
    %v112 = vpop.permute.xlu0 %111
    %vm113 = vcmp.lt.s32.totalorder %v43, 112
    %v114 = vsel %vm113, %v110, %v112
    %v115 = vsel %vm113, %v112, %v110
    %s116 = scalar_lea.vmem [#allocation5], 3
    %v117 = vld [vmem:[%s116] ss:$4 sm:$0x3]
    %v119 = vlaneseq
    %v120 = vshrl.u32 %v119, 7
    %v121 = vsub.s32 0, %v120
    %v122 = vrot.slane %v117, %v121
    %v123 = vlaneseq
    %v124 = vshrl.u32 %v123, 7
    %v125 = vsub.s32 1, %v124
    %v126 = vrot.slane %v117, %v125
    %v129 = vmul.f32 %v114, %v122
    %v130 = vmul.f32 %v115, %v126
    %v131 = vadd.f32 %v85, %v107
    %v132 = vadd.f32 %v86, %v108
    %v133 = vadd.f32 %v131, %v129
    %v134 = vadd.f32 %v132, %v130
    %v135 = vmul.f32 %v36, 9.0
    %v136 = vmul.f32 %v37, 9.0
    %v137 = vsub.f32 %v135, %v133
    %v138 = vsub.f32 %v136, %v134
    %139 = vst [vmem:[#allocation7] sm:$0xff] %v137
    %140 = vst [vmem:[#allocation7 + $0x8] sm:$0xff] %v138
    // Predicated region
    $region18: #{tpu_custom_call.1} parent=1 // pred_check
      _
    $region19: #{tpu_custom_call.1} parent=1 // pred_check_branch
      %142 = sbr.rel (0) target = $region21
    $region20: #{tpu_custom_call.1} parent=1 // pred_region
      %s144 = ssub.s32 256, 256
      %145 = vsyncadd [#allocation4], %s144
      %s147 = sshll.u32 [#allocation7], 4
      %s148 = int_to_ptr.vmem [resolvable:$true] %s147
      %150 = dma.vmem_to_hbm [thread:$0]  %s148, 256, %s2, [#allocation4]
    $region21: #{tpu_custom_call.1} parent=1 // pred_fallthru
      _
    // Predicated region
    $region22: #{tpu_custom_call.1} parent=1 // pred_check
      _
    $region23: #{tpu_custom_call.1} parent=1 // pred_check_branch
      %152 = sbr.rel (0) target = $region25
    $region24: #{tpu_custom_call.1} parent=1 // pred_region
      %153 = dma.done [#allocation4], 256
    $region25: #{tpu_custom_call.1} parent=1 // pred_fallthru
      _
    %154 = vsyncpa [#allocation3], 1
    %155 = vsyncpa [#allocation6], 1
    %156 = vsyncpa [#allocation4], 1

</llo_original>
